<compile_context>
chip_gen: v7x
topology: tpu7x:2x2x1
jax: 0.10.0
libtpu: 0.0.40
codegen_flags: <defaults>
</compile_context>

<pallas_src>
import jax
import jax.numpy as jnp
from jax.experimental import pallas as pl
from jax.experimental.pallas import tpu as pltpu

_LANES = 128
_GATHER_CHUNK = 512          # max speaker-axis chunk for the one-hot select
_MAX_BATCH_TILE = 256        # matches 256x256 MXU height on v6e/v7x


# --------------------------------- kernel ------------------------------------

def speaker_mixture_kernel(ids_ref, mixw_ref, emb_ref, wslab_ref, bias_ref,
                           out_ref):
    ids = ids_ref[...]                           # [TB, S] int32
    raw_w = mixw_ref[...]                        # [TB, S] f32
    tb, s = raw_w.shape

    width = wslab_ref.shape[1]                   # 128
    n_pad = emb_ref.shape[0]                     # padded speaker-table rows
    num_layers = wslab_ref.shape[0] // width     # fused linear layers

    # Numerically-stable softmax numerator; normalization deferred.
    m = jnp.max(raw_w, axis=1, keepdims=True)
    e = jnp.exp(raw_w - m)                       # [TB, S] f32
    denom = jnp.sum(e, axis=1, keepdims=True)    # [TB, 1] f32

    # Weighted one-hot "gather", chunked over the speaker axis so the select
    # intermediate is at most [TB, S, _GATHER_CHUNK]; bf16 MXU matmul per
    # chunk, f32 accumulation.
    tk = min(n_pad, _GATHER_CHUNK)
    mixed = jnp.zeros((tb, width), jnp.float32)
    for c0 in range(0, n_pad, tk):
        tk_c = min(tk, n_pad - c0)               # static; multiple of 16
        iota = jax.lax.broadcasted_iota(jnp.int32, (tb, s, tk_c), 2) + c0
        w_sel = jnp.where(ids[:, :, None] == iota, e[:, :, None], 0.0)
        w_mat = jnp.sum(w_sel, axis=1)           # [TB, tk_c] f32
        emb_c = emb_ref[c0:c0 + tk_c, :]         # [tk_c, 128] bf16
        mixed = mixed + jnp.dot(w_mat.astype(jnp.bfloat16), emb_c,
                                preferred_element_type=jnp.float32)
    mixed = mixed / denom                        # exact softmax normalization

    # Fused transform_net + mixture_net MLP (3 matmuls for hidden_dims=[H,H]).
    h = mixed
    for l in range(num_layers):
        w_l = wslab_ref[l * width:(l + 1) * width, :]   # [128, 128] bf16
        b_l = bias_ref[l:l + 1, :]                      # [1, 128] f32
        h = jnp.dot(h.astype(w_l.dtype), w_l,
                    preferred_element_type=jnp.float32) + b_l
        if l < num_layers - 1:
            h = jnp.where(h > 0, h, 0.1 * h)            # LeakyReLU(0.1), f32
    out_ref[...] = h.astype(out_ref.dtype)              # [TB, 128]


# ------------------------------ param packing --------------------------------

def fuse_and_pack_params(params):
    """Fuse transform/mixture MLPs; pack weights / table / biases as slabs."""
    emb = params["emb"]                          # [N, D] f32
    t_layers = params["transform"]               # list of (w [in,out], b [1,out])
    m_layers = params["mixture"]
    num_layers = len(t_layers)
    assert num_layers == len(m_layers) and 1 <= num_layers <= 8

    fused = []
    for l in range(num_layers):
        tw, tb = t_layers[l]
        mw, mb = m_layers[l]
        if num_layers == 1:
            w, b = tw + mw, tb + mb
        elif l == 0:                             # output-concat
            w = jnp.concatenate([tw, mw], axis=1)
            b = jnp.concatenate([tb, mb], axis=1)
        elif l == num_layers - 1:                # input-stack (fuses final add)
            w = jnp.concatenate([tw, mw], axis=0)
            b = tb + mb
        else:                                    # block-diagonal middle layer
            zt = jnp.zeros((tw.shape[0], mw.shape[1]), jnp.float32)
            zm = jnp.zeros((mw.shape[0], tw.shape[1]), jnp.float32)
            w = jnp.concatenate(
                [jnp.concatenate([tw, zt], axis=1),
                 jnp.concatenate([zm, mw], axis=1)], axis=0)
            b = jnp.concatenate([tb, mb], axis=1)
        assert w.shape[0] <= _LANES and w.shape[1] <= _LANES, (
            "fused layer dims must fit one 128-lane block (D<=128, 2H<=128)")
        fused.append((w, b))

    # bf16 weight slab [L*128, 128] + f32 bias slab [8, 128].
    w_blocks = []
    bias_slab = jnp.zeros((8, _LANES), jnp.float32)
    for l, (w, b) in enumerate(fused):
        wp = jnp.zeros((_LANES, _LANES), jnp.float32)
        wp = wp.at[:w.shape[0], :w.shape[1]].set(w)
        w_blocks.append(wp)
        bias_slab = bias_slab.at[l, :b.shape[1]].set(b[0])
    w_slab = jnp.concatenate(w_blocks, axis=0).astype(jnp.bfloat16)

    # bf16 embedding table, zero-padded: rows to a multiple of 16 (bf16
    # sublane packing), lanes to 128.
    n, d = emb.shape
    n_pad = ((n + 15) // 16) * 16
    emb_slab = (jnp.zeros((n_pad, _LANES), jnp.float32)
                .at[:n, :d].set(emb).astype(jnp.bfloat16))
    return w_slab, emb_slab, bias_slab


# --------------------------------- wrapper -----------------------------------

def speaker_mixture_forward(speaker_id_mixture, params):
    """speaker_id_mixture: [B, S, 2] f32; returns [B, D] f32."""
    emb = params["emb"]
    d = emb.shape[1]
    b, s, _ = speaker_id_mixture.shape

    w_slab, emb_slab, bias_slab = fuse_and_pack_params(params)

    ids = speaker_id_mixture[:, :, 0].astype(jnp.int32)      # [B, S]
    mixw = speaker_id_mixture[:, :, 1].astype(jnp.float32)   # [B, S]

    # Batch tiling: TB multiple of 8, capped at 256; pad B up to a multiple.
    b_pad8 = ((b + 7) // 8) * 8
    tb = min(_MAX_BATCH_TILE, b_pad8)
    b_final = ((b + tb - 1) // tb) * tb
    if b_final != b:
        ids = jnp.pad(ids, ((0, b_final - b), (0, 0)))
        mixw = jnp.pad(mixw, ((0, b_final - b), (0, 0)))
    grid = (b_final // tb,)

    n_pad = emb_slab.shape[0]
    num_layers = w_slab.shape[0] // _LANES

    # Explicit VMEM budget: resident slabs + double-buffered batch tiles +
    # in-kernel select intermediate; capped at 64 MiB (v7x physical VMEM).
    slab_bytes = w_slab.nbytes + emb_slab.nbytes + bias_slab.nbytes
    tile_bytes = tb * s * 4 * 2 + tb * _LANES * 4
    select_bytes = tb * s * min(n_pad, _GATHER_CHUNK) * 4
    vmem_limit = min(64 << 20,
                     max(32 << 20,
                         2 * slab_bytes + 4 * tile_bytes + select_bytes
                         + (1 << 20)))

    out_pad = pl.pallas_call(
        speaker_mixture_kernel,
        out_shape=jax.ShapeDtypeStruct((b_final, _LANES), jnp.float32),
        grid=grid,
        in_specs=[
            pl.BlockSpec((tb, s), lambda i: (i, 0)),               # ids
            pl.BlockSpec((tb, s), lambda i: (i, 0)),               # mix weights
            pl.BlockSpec((n_pad, _LANES), lambda i: (0, 0)),       # emb (resident)
            pl.BlockSpec((num_layers * _LANES, _LANES),
                         lambda i: (0, 0)),                        # MLP weights
            pl.BlockSpec((8, _LANES), lambda i: (0, 0)),           # biases
        ],
        out_specs=pl.BlockSpec((tb, _LANES), lambda i: (i, 0)),
        compiler_params=pltpu.CompilerParams(
            dimension_semantics=("parallel",),
            vmem_limit_bytes=int(vmem_limit)),
    )(ids, mixw, emb_slab, w_slab, bias_slab)
    return out_pad[:b, :d]


# ---------------- deterministic parameter init (mirrors _init_weights) -------

def xavier_uniform(key, fan_in, fan_out):
    bound = (6.0 / (fan_in + fan_out)) ** 0.5
    return jax.random.uniform(key, (fan_in, fan_out), jnp.float32, -bound, bound)


def build_mlp_params(key, input_dim, output_dim, hidden_dims):
    dims = [input_dim] + list(hidden_dims) + [output_dim]
    layers = []
    for i in range(len(dims) - 1):
        key, sub = jax.random.split(key)
        w = xavier_uniform(sub, dims[i], dims[i + 1])           # [in, out]
        b = jnp.zeros((1, dims[i + 1]), jnp.float32)            # constant_(0)
        layers.append((w, b))
    return layers, key


def init_params(key, embedding_dim, num_speakers, hidden_dims):
    key, sub = jax.random.split(key)
    emb = 0.02 * jax.random.normal(sub, (num_speakers, embedding_dim), jnp.float32)
    transform, key = build_mlp_params(key, embedding_dim, embedding_dim, hidden_dims)
    mixture, key = build_mlp_params(key, embedding_dim, embedding_dim, hidden_dims)
    # TODO(synk): timbre/rhythm/articulation nets (attribute_net_dims) are not
    # used by forward(); omitted from the kernel.
    return {"emb": emb, "transform": transform, "mixture": mixture}


# ---------------- pure-JAX reference for validation --------------------------

def reference_forward(speaker_id_mixture, params):
    ids = speaker_id_mixture[:, :, 0].astype(jnp.int32)
    w = speaker_id_mixture[:, :, 1].astype(jnp.float32)
    mixw = jax.nn.softmax(w, axis=1)
    embs = jnp.take(params["emb"], ids, axis=0)                 # [B, S, D]
    mixed = jnp.sum(embs * mixw[:, :, None], axis=1)            # [B, D]

    def mlp(x, layers):
        h = x
        for i, (wgt, b) in enumerate(layers):
            h = h @ wgt + b[0]
            if i < len(layers) - 1:
                h = jnp.where(h > 0, h, 0.1 * h)
        return h

    return mlp(mixed, params["transform"]) + mlp(mixed, params["mixture"])


if __name__ == "__main__":
    embedding_dim = 32
    num_speakers = 16
    hidden_dims = [64, 64]
    batch = 2

    key = jax.random.PRNGKey(0)
    params = init_params(key, embedding_dim, num_speakers, hidden_dims)

    key_ids, key_w = jax.random.split(jax.random.PRNGKey(0), 2)
    ids = jax.random.randint(key_ids, (batch, num_speakers, 1), 0, num_speakers)
    mixw = jax.random.normal(key_w, (batch, num_speakers, 1), jnp.float32)
    speaker_id_mixture = jnp.concatenate(
        [ids.astype(jnp.float32), mixw], axis=-1)               # [B, S, 2]

    out = speaker_mixture_forward(speaker_id_mixture, params)
    out = jax.block_until_ready(out)

    ref = reference_forward(speaker_id_mixture, params)
    assert out.shape == (batch, embedding_dim)
    # bf16 embedding table + bf16 MXU matmuls (f32 accumulation) => loosened tol.
    assert jnp.allclose(out, ref, rtol=5e-2, atol=3e-3), "mismatch vs reference"

    print("KERNEL_OK")
</pallas_src>

<mosaic_0001>
module attributes {stable_mosaic.version = 11 : i64} {
  func.func @speaker_mixture_kernel(%arg0: i32, %arg1: memref<8x16xi32, #tpu.memory_space<vmem>>, %arg2: memref<8x16xf32, #tpu.memory_space<vmem>>, %arg3: memref<16x128xbf16, #tpu.memory_space<vmem>>, %arg4: memref<384x128xbf16, #tpu.memory_space<vmem>>, %arg5: memref<8x128xf32, #tpu.memory_space<vmem>>, %arg6: memref<8x128xf32, #tpu.memory_space<vmem>>) attributes {dimension_semantics = [#tpu.dimension_semantics<parallel>], iteration_bounds = array<i64: 1>, scalar_prefetch = 0 : i64, scratch_operands = 0 : i64, tpu.core_type = #tpu.core_type<tc>, window_params = [{transform_indices = @transform_0, window_bounds = array<i64: 8, 16>}, {transform_indices = @transform_1, window_bounds = array<i64: 8, 16>}, {pipeline_mode = #tpu.pipeline_mode<synchronous>, transform_indices = @transform_2, window_bounds = array<i64: 16, 128>}, {pipeline_mode = #tpu.pipeline_mode<synchronous>, transform_indices = @transform_3, window_bounds = array<i64: 384, 128>}, {pipeline_mode = #tpu.pipeline_mode<synchronous>, transform_indices = @transform_4, window_bounds = array<i64: 8, 128>}, {transform_indices = @transform_5, window_bounds = array<i64: 8, 128>}]} {
    %c0 = arith.constant 0 : index
    %c0_0 = arith.constant 0 : index
    %0 = vector.load %arg1[%c0, %c0_0] : memref<8x16xi32, #tpu.memory_space<vmem>>, vector<8x16xi32>
    %c0_1 = arith.constant 0 : index
    %c0_2 = arith.constant 0 : index
    %1 = vector.load %arg2[%c0_1, %c0_2] : memref<8x16xf32, #tpu.memory_space<vmem>>, vector<8x16xf32>
    %cst = arith.constant dense<0xFF800000> : vector<8xf32>
    %2 = vector.multi_reduction <maximumf>, %1, %cst [1] : vector<8x16xf32> to vector<8xf32>
    %3 = vector.shape_cast %2 : vector<8xf32> to vector<8x1xf32>
    %4 = vector.broadcast %3 : vector<8x1xf32> to vector<8x16xf32>
    %5 = arith.subf %1, %4 : vector<8x16xf32>
    %6 = math.exp %5 : vector<8x16xf32>
    %cst_3 = arith.constant dense<0.000000e+00> : vector<8xf32>
    %7 = vector.multi_reduction <add>, %6, %cst_3 [1] : vector<8x16xf32> to vector<8xf32>
    %8 = vector.shape_cast %7 : vector<8xf32> to vector<8x1xf32>
    %cst_4 = arith.constant 0.000000e+00 : f32
    %9 = vector.broadcast %cst_4 : f32 to vector<8x128xf32>
    %10 = tpu.iota {dimensions = array<i32: 2>} : vector<8x16x16xi32>
    %c0_i32 = arith.constant 0 : i32
    %11 = vector.broadcast %c0_i32 : i32 to vector<8x16x16xi32>
    %12 = arith.addi %10, %11 : vector<8x16x16xi32>
    %13 = vector.shape_cast %0 : vector<8x16xi32> to vector<8x16x1xi32>
    %14 = vector.broadcast %13 : vector<8x16x1xi32> to vector<8x16x16xi32>
    %15 = arith.cmpi eq, %14, %12 : vector<8x16x16xi32>
    %16 = vector.shape_cast %6 : vector<8x16xf32> to vector<8x16x1xf32>
    %cst_5 = arith.constant 0.000000e+00 : f32
    %17 = vector.shape_cast %16 : vector<8x16x1xf32> to vector<8x16x1xf32>
    %18 = vector.broadcast %17 : vector<8x16x1xf32> to vector<8x16x16xf32>
    %19 = vector.broadcast %cst_5 : f32 to vector<8x16x16xf32>
    %20 = arith.select %15, %18, %19 : vector<8x16x16xi1>, vector<8x16x16xf32>
    %cst_6 = arith.constant dense<0.000000e+00> : vector<8x16xf32>
    %21 = vector.multi_reduction <add>, %20, %cst_6 [1] : vector<8x16x16xf32> to vector<8x16xf32>
    %c0_7 = arith.constant 0 : index
    %c0_8 = arith.constant 0 : index
    %22 = vector.load %arg3[%c0_7, %c0_8] : memref<16x128xbf16, #tpu.memory_space<vmem>>, vector<16x128xbf16>
    %23 = arith.truncf %21 : vector<8x16xf32> to vector<8x16xbf16>
    %cst_9 = arith.constant dense<0.000000e+00> : vector<8x128xf32>
    %24 = tpu.matmul %23, %22, %cst_9 {dimension_numbers = #tpu.dot_dimension_numbers<[1], [0], [0], [1], [0, 0, 1, 1], [], []>} : vector<8x16xbf16>, vector<16x128xbf16>, vector<8x128xf32> -> vector<8x128xf32>
    %25 = arith.addf %9, %24 : vector<8x128xf32>
    %26 = vector.broadcast %8 : vector<8x1xf32> to vector<8x128xf32>
    %27 = arith.divf %25, %26 : vector<8x128xf32>
    %c0_10 = arith.constant 0 : index
    %c0_11 = arith.constant 0 : index
    %28 = vector.load %arg4[%c0_10, %c0_11] : memref<384x128xbf16, #tpu.memory_space<vmem>>, vector<128x128xbf16>
    %c0_12 = arith.constant 0 : index
    %c0_13 = arith.constant 0 : index
    %29 = vector.load %arg5[%c0_12, %c0_13] : memref<8x128xf32, #tpu.memory_space<vmem>>, vector<1x128xf32>
    %30 = arith.truncf %27 : vector<8x128xf32> to vector<8x128xbf16>
    %cst_14 = arith.constant dense<0.000000e+00> : vector<8x128xf32>
    %31 = tpu.matmul %30, %28, %cst_14 {dimension_numbers = #tpu.dot_dimension_numbers<[1], [0], [0], [1], [0, 0, 1, 1], [], []>} : vector<8x128xbf16>, vector<128x128xbf16>, vector<8x128xf32> -> vector<8x128xf32>
    %32 = vector.broadcast %29 : vector<1x128xf32> to vector<8x128xf32>
    %33 = arith.addf %31, %32 : vector<8x128xf32>
    %cst_15 = arith.constant 0.000000e+00 : f32
    %34 = vector.broadcast %cst_15 : f32 to vector<8x128xf32>
    %35 = arith.cmpf ogt, %33, %34 : vector<8x128xf32>
    %cst_16 = arith.constant 1.000000e-01 : f32
    %36 = vector.broadcast %cst_16 : f32 to vector<8x128xf32>
    %37 = arith.mulf %36, %33 : vector<8x128xf32>
    %38 = arith.select %35, %33, %37 : vector<8x128xi1>, vector<8x128xf32>
    %c128 = arith.constant 128 : index
    %c0_17 = arith.constant 0 : index
    %39 = vector.load %arg4[%c128, %c0_17] : memref<384x128xbf16, #tpu.memory_space<vmem>>, vector<128x128xbf16>
    %c1 = arith.constant 1 : index
    %c0_18 = arith.constant 0 : index
    %40 = vector.load %arg5[%c1, %c0_18] : memref<8x128xf32, #tpu.memory_space<vmem>>, vector<1x128xf32>
    %41 = arith.truncf %38 : vector<8x128xf32> to vector<8x128xbf16>
    %cst_19 = arith.constant dense<0.000000e+00> : vector<8x128xf32>
    %42 = tpu.matmul %41, %39, %cst_19 {dimension_numbers = #tpu.dot_dimension_numbers<[1], [0], [0], [1], [0, 0, 1, 1], [], []>} : vector<8x128xbf16>, vector<128x128xbf16>, vector<8x128xf32> -> vector<8x128xf32>
    %43 = vector.broadcast %40 : vector<1x128xf32> to vector<8x128xf32>
    %44 = arith.addf %42, %43 : vector<8x128xf32>
    %cst_20 = arith.constant 0.000000e+00 : f32
    %45 = vector.broadcast %cst_20 : f32 to vector<8x128xf32>
    %46 = arith.cmpf ogt, %44, %45 : vector<8x128xf32>
    %cst_21 = arith.constant 1.000000e-01 : f32
    %47 = vector.broadcast %cst_21 : f32 to vector<8x128xf32>
    %48 = arith.mulf %47, %44 : vector<8x128xf32>
    %49 = arith.select %46, %44, %48 : vector<8x128xi1>, vector<8x128xf32>
    %c256 = arith.constant 256 : index
    %c0_22 = arith.constant 0 : index
    %50 = vector.load %arg4[%c256, %c0_22] : memref<384x128xbf16, #tpu.memory_space<vmem>>, vector<128x128xbf16>
    %c2 = arith.constant 2 : index
    %c0_23 = arith.constant 0 : index
    %51 = vector.load %arg5[%c2, %c0_23] : memref<8x128xf32, #tpu.memory_space<vmem>>, vector<1x128xf32>
    %52 = arith.truncf %49 : vector<8x128xf32> to vector<8x128xbf16>
    %cst_24 = arith.constant dense<0.000000e+00> : vector<8x128xf32>
    %53 = tpu.matmul %52, %50, %cst_24 {dimension_numbers = #tpu.dot_dimension_numbers<[1], [0], [0], [1], [0, 0, 1, 1], [], []>} : vector<8x128xbf16>, vector<128x128xbf16>, vector<8x128xf32> -> vector<8x128xf32>
    %54 = vector.broadcast %51 : vector<1x128xf32> to vector<8x128xf32>
    %55 = arith.addf %53, %54 : vector<8x128xf32>
    %c0_25 = arith.constant 0 : index
    %c0_26 = arith.constant 0 : index
    %56 = vector.load %arg6[%c0_25, %c0_26] : memref<8x128xf32, #tpu.memory_space<vmem>>, vector<8x128xf32>
    tpu.vector_store %arg6[%c0_25, %c0_26], %55 {strides = array<i32>} : memref<8x128xf32, #tpu.memory_space<vmem>>, vector<8x128xf32>,
    return
  }
  func.func @transform_0(%arg0: i32) -> (i32, i32) {
    %c0_i32 = arith.constant 0 : i32
    %c0_i32_0 = arith.constant 0 : i32
    return %arg0, %c0_i32 : i32, i32
  }
  func.func @transform_1(%arg0: i32) -> (i32, i32) {
    %c0_i32 = arith.constant 0 : i32
    %c0_i32_0 = arith.constant 0 : i32
    return %arg0, %c0_i32 : i32, i32
  }
  func.func @transform_2(%arg0: i32) -> (i32, i32) {
    %c0_i32 = arith.constant 0 : i32
    %c0_i32_0 = arith.constant 0 : i32
    %c0_i32_1 = arith.constant 0 : i32
    return %c0_i32, %c0_i32_0 : i32, i32
  }
  func.func @transform_3(%arg0: i32) -> (i32, i32) {
    %c0_i32 = arith.constant 0 : i32
    %c0_i32_0 = arith.constant 0 : i32
    %c0_i32_1 = arith.constant 0 : i32
    return %c0_i32, %c0_i32_0 : i32, i32
  }
  func.func @transform_4(%arg0: i32) -> (i32, i32) {
    %c0_i32 = arith.constant 0 : i32
    %c0_i32_0 = arith.constant 0 : i32
    %c0_i32_1 = arith.constant 0 : i32
    return %c0_i32, %c0_i32_0 : i32, i32
  }
  func.func @transform_5(%arg0: i32) -> (i32, i32) {
    %c0_i32 = arith.constant 0 : i32
    %c0_i32_0 = arith.constant 0 : i32
    return %arg0, %c0_i32 : i32, i32
  }
}

</mosaic_0001>

<llo_original>
// kernel: tpu_custom_call.1
$region0: #{tpu_custom_call.1}
  #allocation0 [shape = 'u32[]', space=smem, size = 0x4, offset = 0x4, fixed_abs, tag = 'smem constant byte address 0x4 - core index']
  #allocation1 [shape = 'u32[144,128]{1,0:T(1,128)}', space=vmem, size = 0x12000, scoped, tag = 'internal scratch']
  %s0 = inlined_call_operand.hbm [shape: s32[8,16], index: 0, kind: input, shape index: {}]
  %s1 = inlined_call_operand.hbm [shape: f32[8,16], index: 1, kind: input, shape index: {}]
  %s2 = inlined_call_operand.hbm [shape: bf16[16,128], index: 2, kind: input, shape index: {}]
  %s3 = inlined_call_operand.hbm [shape: bf16[384,128], index: 3, kind: input, shape index: {}]
  %s4 = inlined_call_operand.vmem [shape: f32[8,128], index: 4, kind: input, shape index: {}]
  %s5 = inlined_call_operand.hbm [shape: f32[8,128], index: 5, kind: output, shape index: {}]
  %s6 = sld [smem:[#allocation0]]
  $region46: #{tpu_custom_call.1} parent=0
    _
  %s8 = ssub.s32 1, %s6
  %s9 = scalar_select 0, %s8, %s6
  $region1: #{tpu_custom_call.1} parent=0
    #allocation2 [shape = 'u8[4096]{0}', space=vmem, size = 0x1000, scoped, tag = 'input window, operand 0, single buffered']
    #allocation3 [shape = 's32[1]{0}', space=sflag, size = 0x4, scoped, tag = 'scoped memory for tpu_custom_call.1']
    #allocation4 [shape = 's32[1]{0}', space=sflag, size = 0x4, scoped, tag = 'scoped memory for tpu_custom_call.1']
    #allocation5 [shape = 'u8[4096]{0}', space=vmem, size = 0x1000, scoped, tag = 'input window, operand 1, single buffered']
    #allocation6 [shape = 's32[1]{0}', space=sflag, size = 0x4, scoped, tag = 'scoped memory for tpu_custom_call.1']
    #allocation7 [shape = 'u8[4096]{0}', space=vmem, size = 0x1000, scoped, tag = 'input window, operand 2, single buffered']
    #allocation8 [shape = 'u8[98304]{0}', space=vmem, size = 0x18000, scoped, tag = 'input window, operand 3, single buffered']
    #allocation9 [shape = 's32[1]{0}', space=sflag, size = 0x4, scoped, tag = 'scoped memory for tpu_custom_call.1']
    #allocation10 [shape = 'u8[4096]{0}', space=vmem, size = 0x1000, scoped, tag = 'output window, operand 0, single buffered']
    %10 = vsyncpa [#allocation3], 0
    %11 = vsyncpa [#allocation6], 0
    %12 = vsyncpa [#allocation9], 0
    %13 = vsyncpa [#allocation4], 0
    // Predicated region
    $region2: #{tpu_custom_call.1} parent=1 // pred_check
      _
    $region3: #{tpu_custom_call.1} parent=1 // pred_check_branch
      %15 = sbr.rel (0) target = $region5
    $region4: #{tpu_custom_call.1} parent=1 // pred_region
      %s17 = ssub.s32 128, 128
      %18 = vsyncadd [#allocation3], %s17
      %s20 = sshll.u32 [#allocation2], 4
      %s21 = int_to_ptr.vmem [resolvable:$true] %s20
      %23 = dma.hbm_to_vmem [thread:$0]  %s0, 128, %s21, [#allocation3]
    $region5: #{tpu_custom_call.1} parent=1 // pred_fallthru
      _
    // Predicated region
    $region6: #{tpu_custom_call.1} parent=1 // pred_check
      _
    $region7: #{tpu_custom_call.1} parent=1 // pred_check_branch
      %25 = sbr.rel (0) target = $region9
    $region8: #{tpu_custom_call.1} parent=1 // pred_region
      %s27 = ssub.s32 128, 128
      %28 = vsyncadd [#allocation6], %s27
      %s30 = sshll.u32 [#allocation5], 4
      %s31 = int_to_ptr.vmem [resolvable:$true] %s30
      %33 = dma.hbm_to_vmem [thread:$0]  %s1, 128, %s31, [#allocation6]
    $region9: #{tpu_custom_call.1} parent=1 // pred_fallthru
      _
    // Predicated region
    $region10: #{tpu_custom_call.1} parent=1 // pred_check
      _
    $region11: #{tpu_custom_call.1} parent=1 // pred_check_branch
      %35 = sbr.rel (0) target = $region13
    $region12: #{tpu_custom_call.1} parent=1 // pred_region
      %s37 = ssub.s32 128, 128
      %38 = vsyncadd [#allocation6], %s37
      %s39 = sshll.u32 [#allocation7], 4
      %s40 = int_to_ptr.vmem [resolvable:$true] %s39
      %45 = dma.hbm_to_vmem [thread:$0]  %s2, 128, %s40, [#allocation6], 64, 64, 4
    $region13: #{tpu_custom_call.1} parent=1 // pred_fallthru
      _
    // Predicated region
    $region14: #{tpu_custom_call.1} parent=1 // pred_check
      _
    $region15: #{tpu_custom_call.1} parent=1 // pred_check_branch
      %47 = sbr.rel (0) target = $region17
    $region16: #{tpu_custom_call.1} parent=1 // pred_region
      %s49 = ssub.s32 3072, 3072
      %50 = vsyncadd [#allocation9], %s49
      %s51 = sshll.u32 [#allocation8], 4
      %s52 = int_to_ptr.vmem [resolvable:$true] %s51
      %57 = dma.hbm_to_vmem [thread:$0]  %s3, 3072, %s52, [#allocation9], 64, 64, 4
    $region17: #{tpu_custom_call.1} parent=1 // pred_fallthru
      _
    // Predicated region
    $region18: #{tpu_custom_call.1} parent=1 // pred_check
      _
    $region19: #{tpu_custom_call.1} parent=1 // pred_check_branch
      %59 = sbr.rel (0) target = $region21
    $region20: #{tpu_custom_call.1} parent=1 // pred_region
      _
    $region21: #{tpu_custom_call.1} parent=1 // pred_fallthru
      _
    // Predicated region
    $region22: #{tpu_custom_call.1} parent=1 // pred_check
      _
    $region23: #{tpu_custom_call.1} parent=1 // pred_check_branch
      %61 = sbr.rel (0) target = $region25
    $region24: #{tpu_custom_call.1} parent=1 // pred_region
      %62 = dma.done [#allocation3], 128
    $region25: #{tpu_custom_call.1} parent=1 // pred_fallthru
      _
    // Predicated region
    $region26: #{tpu_custom_call.1} parent=1 // pred_check
      _
    $region27: #{tpu_custom_call.1} parent=1 // pred_check_branch
      %64 = sbr.rel (0) target = $region29
    $region28: #{tpu_custom_call.1} parent=1 // pred_region
      %65 = dma.done [#allocation6], 128
    $region29: #{tpu_custom_call.1} parent=1 // pred_fallthru
      _
    // Predicated region
    $region30: #{tpu_custom_call.1} parent=1 // pred_check
      _
    $region31: #{tpu_custom_call.1} parent=1 // pred_check_branch
      %67 = sbr.rel (0) target = $region33
    $region32: #{tpu_custom_call.1} parent=1 // pred_region
      %68 = dma.done [#allocation6], 128
    $region33: #{tpu_custom_call.1} parent=1 // pred_fallthru
      _
    // Predicated region
    $region34: #{tpu_custom_call.1} parent=1 // pred_check
      _
    $region35: #{tpu_custom_call.1} parent=1 // pred_check_branch
      %70 = sbr.rel (0) target = $region37
    $region36: #{tpu_custom_call.1} parent=1 // pred_region
      %71 = dma.done [#allocation9], 3072
    $region37: #{tpu_custom_call.1} parent=1 // pred_fallthru
      _
    %v73 = vld [vmem:[#allocation2] sm:$0xff]
    %v74 = vld [vmem:[#allocation5] sm:$0xff]
    %vm75 = vcmask 130048
    %v76 = vsel %vm75, %v74, -inf
    %77 = vmax.xlane.f32.xlu0 %v76
    %v78 = vpop.xlane.xlu0 %77
    %v79 = vsub.f32 %v74, %v78
    %v80 = vmul.f32 %v79, 1.442695
    %v81 = vpow.pop %v80
    %v82 = vsel %vm75, %v81, 0.0
    %83 = vadd.xlane.f32.xlu0 %v82
    %v84 = vpop.xlane.xlu0 %83
    %v85 = vlaneseq
    %v86 = vand.u32 %v85, 127
    %v87 = vlaneseq
    %v88 = vshrl.u32 %v87, 7
    %v89 = vsub.s32 0, %v88
    %v90 = vrot.slane %v73, %v89
    %92 = vbcast.lane.b32.xlu0 %v90, 256
    %v93 = vpop.permute.xlu0 %92
    %s95 = sor.u32 256, 8
    %96 = vbcast.lane.b32.xlu0 %v90, %s95
    %v97 = vpop.permute.xlu0 %96
    %v98 = vlaneseq
    %v99 = vshrl.u32 %v98, 7
    %v100 = vsub.s32 1, %v99
    %v101 = vrot.slane %v73, %v100
    %103 = vbcast.lane.b32.xlu0 %v101, 256
    %v104 = vpop.permute.xlu0 %103
    %s106 = sor.u32 256, 8
    %107 = vbcast.lane.b32.xlu0 %v101, %s106
    %v108 = vpop.permute.xlu0 %107
    %v109 = vlaneseq
    %v110 = vshrl.u32 %v109, 7
    %v111 = vsub.s32 2, %v110
    %v112 = vrot.slane %v73, %v111
    %114 = vbcast.lane.b32.xlu0 %v112, 256
    %v115 = vpop.permute.xlu0 %114
    %s117 = sor.u32 256, 8
    %118 = vbcast.lane.b32.xlu0 %v112, %s117
    %v119 = vpop.permute.xlu0 %118
    %v120 = vlaneseq
    %v121 = vshrl.u32 %v120, 7
    %v122 = vsub.s32 3, %v121
    %v123 = vrot.slane %v73, %v122
    %125 = vbcast.lane.b32.xlu0 %v123, 256
    %v126 = vpop.permute.xlu0 %125
    %s128 = sor.u32 256, 8
    %129 = vbcast.lane.b32.xlu0 %v123, %s128
    %v130 = vpop.permute.xlu0 %129
    %v131 = vlaneseq
    %v132 = vshrl.u32 %v131, 7
    %v133 = vsub.s32 4, %v132
    %v134 = vrot.slane %v73, %v133
    %136 = vbcast.lane.b32.xlu0 %v134, 256
    %v137 = vpop.permute.xlu0 %136
    %s139 = sor.u32 256, 8
    %140 = vbcast.lane.b32.xlu0 %v134, %s139
    %v141 = vpop.permute.xlu0 %140
    %v142 = vlaneseq
    %v143 = vshrl.u32 %v142, 7
    %v144 = vsub.s32 5, %v143
    %v145 = vrot.slane %v73, %v144
    %147 = vbcast.lane.b32.xlu0 %v145, 256
    %v148 = vpop.permute.xlu0 %147
    %s150 = sor.u32 256, 8
    %151 = vbcast.lane.b32.xlu0 %v145, %s150
    %v152 = vpop.permute.xlu0 %151
    %v153 = vlaneseq
    %v154 = vshrl.u32 %v153, 7
    %v155 = vsub.s32 6, %v154
    %v156 = vrot.slane %v73, %v155
    %158 = vbcast.lane.b32.xlu0 %v156, 256
    %v159 = vpop.permute.xlu0 %158
    %s161 = sor.u32 256, 8
    %162 = vbcast.lane.b32.xlu0 %v156, %s161
    %v163 = vpop.permute.xlu0 %162
    %v164 = vlaneseq
    %v165 = vshrl.u32 %v164, 7
    %v166 = vsub.s32 7, %v165
    %v167 = vrot.slane %v73, %v166
    %169 = vbcast.lane.b32.xlu0 %v167, 256
    %v170 = vpop.permute.xlu0 %169
    %s172 = sor.u32 256, 8
    %173 = vbcast.lane.b32.xlu0 %v167, %s172
    %v174 = vpop.permute.xlu0 %173
    %vm175 = vcmp.eq.s32.totalorder %v93, %v86
    %vm176 = vcmp.eq.s32.totalorder %v97, %v86
    %vm177 = vcmp.eq.s32.totalorder %v104, %v86
    %vm178 = vcmp.eq.s32.totalorder %v108, %v86
    %vm179 = vcmp.eq.s32.totalorder %v115, %v86
    %vm180 = vcmp.eq.s32.totalorder %v119, %v86
    %vm181 = vcmp.eq.s32.totalorder %v126, %v86
    %vm182 = vcmp.eq.s32.totalorder %v130, %v86
    %vm183 = vcmp.eq.s32.totalorder %v137, %v86
    %vm184 = vcmp.eq.s32.totalorder %v141, %v86
    %vm185 = vcmp.eq.s32.totalorder %v148, %v86
    %vm186 = vcmp.eq.s32.totalorder %v152, %v86
    %vm187 = vcmp.eq.s32.totalorder %v159, %v86
    %vm188 = vcmp.eq.s32.totalorder %v163, %v86
    %vm189 = vcmp.eq.s32.totalorder %v170, %v86
    %vm190 = vcmp.eq.s32.totalorder %v174, %v86
    %v191 = vlaneseq
    %v192 = vshrl.u32 %v191, 7
    %v193 = vsub.s32 0, %v192
    %v194 = vrot.slane %v81, %v193
    %196 = vbcast.lane.b32.xlu0 %v194, 256
    %v197 = vpop.permute.xlu0 %196
    %s199 = sor.u32 256, 8
    %200 = vbcast.lane.b32.xlu0 %v194, %s199
    %v201 = vpop.permute.xlu0 %200
    %v202 = vlaneseq
    %v203 = vshrl.u32 %v202, 7
    %v204 = vsub.s32 1, %v203
    %v205 = vrot.slane %v81, %v204
    %207 = vbcast.lane.b32.xlu0 %v205, 256
    %v208 = vpop.permute.xlu0 %207
    %s210 = sor.u32 256, 8
    %211 = vbcast.lane.b32.xlu0 %v205, %s210
    %v212 = vpop.permute.xlu0 %211
    %v213 = vlaneseq
    %v214 = vshrl.u32 %v213, 7
    %v215 = vsub.s32 2, %v214
    %v216 = vrot.slane %v81, %v215
    %218 = vbcast.lane.b32.xlu0 %v216, 256
    %v219 = vpop.permute.xlu0 %218
    %s221 = sor.u32 256, 8
    %222 = vbcast.lane.b32.xlu0 %v216, %s221
    %v223 = vpop.permute.xlu0 %222
    %v224 = vlaneseq
    %v225 = vshrl.u32 %v224, 7
    %v226 = vsub.s32 3, %v225
    %v227 = vrot.slane %v81, %v226
    %229 = vbcast.lane.b32.xlu0 %v227, 256
    %v230 = vpop.permute.xlu0 %229
    %s232 = sor.u32 256, 8
    %233 = vbcast.lane.b32.xlu0 %v227, %s232
    %v234 = vpop.permute.xlu0 %233
    %v235 = vlaneseq
    %v236 = vshrl.u32 %v235, 7
    %v237 = vsub.s32 4, %v236
    %v238 = vrot.slane %v81, %v237
    %240 = vbcast.lane.b32.xlu0 %v238, 256
    %v241 = vpop.permute.xlu0 %240
    %s243 = sor.u32 256, 8
    %244 = vbcast.lane.b32.xlu0 %v238, %s243
    %v245 = vpop.permute.xlu0 %244
    %v246 = vlaneseq
    %v247 = vshrl.u32 %v246, 7
    %v248 = vsub.s32 5, %v247
    %v249 = vrot.slane %v81, %v248
    %251 = vbcast.lane.b32.xlu0 %v249, 256
    %v252 = vpop.permute.xlu0 %251
    %s254 = sor.u32 256, 8
    %255 = vbcast.lane.b32.xlu0 %v249, %s254
    %v256 = vpop.permute.xlu0 %255
    %v257 = vlaneseq
    %v258 = vshrl.u32 %v257, 7
    %v259 = vsub.s32 6, %v258
    %v260 = vrot.slane %v81, %v259
    %262 = vbcast.lane.b32.xlu0 %v260, 256
    %v263 = vpop.permute.xlu0 %262
    %s265 = sor.u32 256, 8
    %266 = vbcast.lane.b32.xlu0 %v260, %s265
    %v267 = vpop.permute.xlu0 %266
    %v268 = vlaneseq
    %v269 = vshrl.u32 %v268, 7
    %v270 = vsub.s32 7, %v269
    %v271 = vrot.slane %v81, %v270
    %273 = vbcast.lane.b32.xlu0 %v271, 256
    %v274 = vpop.permute.xlu0 %273
    %s276 = sor.u32 256, 8
    %277 = vbcast.lane.b32.xlu0 %v271, %s276
    %v278 = vpop.permute.xlu0 %277
    %v279 = vsel %vm175, %v197, 0.0
    %v280 = vsel %vm176, %v201, 0.0
    %v281 = vsel %vm177, %v208, 0.0
    %v282 = vsel %vm178, %v212, 0.0
    %v283 = vsel %vm179, %v219, 0.0
    %v284 = vsel %vm180, %v223, 0.0
    %v285 = vsel %vm181, %v230, 0.0
    %v286 = vsel %vm182, %v234, 0.0
    %v287 = vsel %vm183, %v241, 0.0
    %v288 = vsel %vm184, %v245, 0.0
    %v289 = vsel %vm185, %v252, 0.0
    %v290 = vsel %vm186, %v256, 0.0
    %v291 = vsel %vm187, %v263, 0.0
    %v292 = vsel %vm188, %v267, 0.0
    %v293 = vsel %vm189, %v274, 0.0
    %v294 = vsel %vm190, %v278, 0.0
    %v295 = vsel %vm75, %v279, 0.0
    %v296 = vsel %vm75, %v280, 0.0
    %v297 = vadd.f32 %v295, %v296
    %v298 = vrot.slane %v297, 4
    %v299 = vadd.f32 %v297, %v298
    %v300 = vrot.slane %v299, 2
    %v301 = vadd.f32 %v299, %v300
    %v302 = vrot.slane %v301, 1
    %v303 = vadd.f32 %v301, %v302
    %v304 = vsel %vm75, %v281, 0.0
    %v305 = vsel %vm75, %v282, 0.0
    %v306 = vadd.f32 %v304, %v305
    %v307 = vrot.slane %v306, 4
    %v308 = vadd.f32 %v306, %v307
    %v309 = vrot.slane %v308, 2
    %v310 = vadd.f32 %v308, %v309
    %v311 = vrot.slane %v310, 1
    %v312 = vadd.f32 %v310, %v311
    %v313 = vsel %vm75, %v283, 0.0
    %v314 = vsel %vm75, %v284, 0.0
    %v315 = vadd.f32 %v313, %v314
    %v316 = vrot.slane %v315, 4
    %v317 = vadd.f32 %v315, %v316
    %v318 = vrot.slane %v317, 2
    %v319 = vadd.f32 %v317, %v318
    %v320 = vrot.slane %v319, 1
    %v321 = vadd.f32 %v319, %v320
    %v322 = vsel %vm75, %v285, 0.0
    %v323 = vsel %vm75, %v286, 0.0
    %v324 = vadd.f32 %v322, %v323
    %v325 = vrot.slane %v324, 4
    %v326 = vadd.f32 %v324, %v325
    %v327 = vrot.slane %v326, 2
    %v328 = vadd.f32 %v326, %v327
    %v329 = vrot.slane %v328, 1
    %v330 = vadd.f32 %v328, %v329
    %v331 = vsel %vm75, %v287, 0.0
    %v332 = vsel %vm75, %v288, 0.0
    %v333 = vadd.f32 %v331, %v332
    %v334 = vrot.slane %v333, 4
    %v335 = vadd.f32 %v333, %v334
    %v336 = vrot.slane %v335, 2
    %v337 = vadd.f32 %v335, %v336
    %v338 = vrot.slane %v337, 1
    %v339 = vadd.f32 %v337, %v338
    %v340 = vsel %vm75, %v289, 0.0
    %v341 = vsel %vm75, %v290, 0.0
    %v342 = vadd.f32 %v340, %v341
    %v343 = vrot.slane %v342, 4
    %v344 = vadd.f32 %v342, %v343
    %v345 = vrot.slane %v344, 2
    %v346 = vadd.f32 %v344, %v345
    %v347 = vrot.slane %v346, 1
    %v348 = vadd.f32 %v346, %v347
    %v349 = vsel %vm75, %v291, 0.0
    %v350 = vsel %vm75, %v292, 0.0
    %v351 = vadd.f32 %v349, %v350
    %v352 = vrot.slane %v351, 4
    %v353 = vadd.f32 %v351, %v352
    %v354 = vrot.slane %v353, 2
    %v355 = vadd.f32 %v353, %v354
    %v356 = vrot.slane %v355, 1
    %v357 = vadd.f32 %v355, %v356
    %v358 = vsel %vm75, %v293, 0.0
    %v359 = vsel %vm75, %v294, 0.0
    %v360 = vadd.f32 %v358, %v359
    %v361 = vrot.slane %v360, 4
    %v362 = vadd.f32 %v360, %v361
    %v363 = vrot.slane %v362, 2
    %v364 = vadd.f32 %v362, %v363
    %v365 = vrot.slane %v364, 1
    %v366 = vadd.f32 %v364, %v365
    %v367 = vld [vmem:[#allocation7] sm:$0xf]
    %v368 = vld [vmem:[#allocation7 + $0x4] sm:$0xf]
    %v369 = vpack.c.bf16 %v303, %v303
    %v370 = vpack.c.bf16 %v312, %v312
    %v371 = vpack.c.bf16 %v321, %v321
    %v372 = vpack.c.bf16 %v330, %v330
    %v373 = vpack.c.bf16 %v339, %v339
    %v374 = vpack.c.bf16 %v348, %v348
    %v375 = vpack.c.bf16 %v357, %v357
    %v376 = vpack.c.bf16 %v366, %v366
    %v385 = vunpack.c.l.b16 %v369
    %v386 = vunpack.c.l.b16 %v370
    %v387 = vunpack.c.l.b16 %v371
    %v388 = vunpack.c.l.b16 %v372
    %v389 = vunpack.c.l.b16 %v373
    %v390 = vunpack.c.l.b16 %v374
    %v391 = vunpack.c.l.b16 %v375
    %v392 = vunpack.c.l.b16 %v376
    %vm393 = vcmask 1041409
    %v394 = vsel %vm393, %v386, %v385
    %vm395 = vcmask 1042434
    %v396 = vsel %vm395, %v387, %v394
    %vm397 = vcmask 1043459
    %v398 = vsel %vm397, %v388, %v396
    %vm399 = vcmask 1044484
    %v400 = vsel %vm399, %v389, %v398
    %vm401 = vcmask 1045509
    %v402 = vsel %vm401, %v390, %v400
    %vm403 = vcmask 1046534
    %v404 = vsel %vm403, %v391, %v402
    %vm405 = vcmask 1047559
    %v406 = vsel %vm405, %v392, %v404
    %v407 = vpack.c.b16 %v406, %v406
    %v410 = vunpack.c.l.b16 %v367
    %v411 = vunpack.c.l.b16 %v368
    %v412 = vpack.c.b16 %v411, %v410
    %v415 = vsel %vm75, %v407, 0
    %417 = vmatprep.subr.bf16.mxu0 0
    %418 = vmatpush1.bf16.msra.mxu0 %v412
    %419 = vmatprep.subr.bf16.mxu0 0
    %420 = vmatpush1.bf16.msra.mxu0 0
    %421 = vmatprep.subr.bf16.mxu0 0
    %422 = vmatpush1.bf16.msra.mxu0 0
    %423 = vmatprep.subr.bf16.mxu0 0
    %424 = vmatpush1.bf16.msra.mxu0 0
    %425 = vmatprep.subr.bf16.mxu0 0
    %426 = vmatpush1.bf16.msra.mxu0 0
    %427 = vmatprep.subr.bf16.mxu0 0
    %428 = vmatpush1.bf16.msra.mxu0 0
    %429 = vmatprep.subr.bf16.mxu0 0
    %430 = vmatpush1.bf16.msra.mxu0 0
    %431 = vmatprep.subr.bf16.mxu0 0
    %432 = vmatpush1.bf16.msra.mxu0 0
    %433 = vmatprep.subr.bf16.mxu0 0
    %434 = vmatpush1.bf16.msra.mxu0 0
    %435 = vmatprep.subr.bf16.mxu0 0
    %436 = vmatpush1.bf16.msra.mxu0 0
    %437 = vmatprep.subr.bf16.mxu0 0
    %438 = vmatpush1.bf16.msra.mxu0 0
    %439 = vmatprep.subr.bf16.mxu0 0
    %440 = vmatpush1.bf16.msra.mxu0 0
    %441 = vmatprep.subr.bf16.mxu0 0
    %442 = vmatpush1.bf16.msra.mxu0 0
    %443 = vmatprep.subr.bf16.mxu0 0
    %444 = vmatpush1.bf16.msra.mxu0 0
    %445 = vmatprep.subr.bf16.mxu0 0
    %446 = vmatpush1.bf16.msra.mxu0 0
    %447 = vmatprep.subr.bf16.mxu0 0
    %448 = vmatpush1.bf16.msra.mxu0 0
    %449 = vmatprep.mubr.bf16.mxu0 0
    %450 = vmatmul.mubr.bf16.gmra.mrb[0].mxu0 %v415
    %v451 = vpop.f32.mrb[0].mxu0
    %v452 = vadd.f32 0.0, %v451
    %v453 = vpop.f32.mrb[0].mxu0
    %v454 = vpop.f32.mrb[0].mxu0
    %v455 = vpop.f32.mrb[0].mxu0
    %456 = vdwg.mxu0
    %v457 = vrcp.pop %v84
    %v458 = vmul.f32 %v452, %v457
    %v459 = vld [vmem:[#allocation8] sm:$0xf]
    %v460 = vld [vmem:[#allocation8 + $0x4] sm:$0xf]
    %v461 = vld [vmem:[#allocation8 + $0x8] sm:$0xf]
    %v462 = vld [vmem:[#allocation8 + $0xc] sm:$0xf]
    %v463 = vld [vmem:[#allocation8 + $0x10] sm:$0xf]
    %v464 = vld [vmem:[#allocation8 + $0x14] sm:$0xf]
    %v465 = vld [vmem:[#allocation8 + $0x18] sm:$0xf]
    %v466 = vld [vmem:[#allocation8 + $0x1c] sm:$0xf]
    %v467 = vld [vmem:[#allocation8 + $0x20] sm:$0xf]
    %v468 = vld [vmem:[#allocation8 + $0x24] sm:$0xf]
    %v469 = vld [vmem:[#allocation8 + $0x28] sm:$0xf]
    %v470 = vld [vmem:[#allocation8 + $0x2c] sm:$0xf]
    %v471 = vld [vmem:[#allocation8 + $0x30] sm:$0xf]
    %v472 = vld [vmem:[#allocation8 + $0x34] sm:$0xf]
    %v473 = vld [vmem:[#allocation8 + $0x38] sm:$0xf]
    %v474 = vld [vmem:[#allocation8 + $0x3c] sm:$0xf]
    %v475 = vld [vmem:[%s4] sm:$0x1]
    %v476 = vpack.c.bf16 %v458, %v458
    %v477 = vlaneseq
    %v478 = vshrl.u32 %v477, 7
    %v479 = vsub.s32 0, %v478
    %v480 = vrot.slane %v475, %v479
    %v497 = vunpack.c.l.b16 %v459
    %v498 = vunpack.c.l.b16 %v460
    %v499 = vunpack.c.l.b16 %v461
    %v500 = vunpack.c.l.b16 %v462
    %v501 = vunpack.c.l.b16 %v463
    %v502 = vunpack.c.l.b16 %v464
    %v503 = vunpack.c.l.b16 %v465
    %v504 = vunpack.c.l.b16 %v466
    %v505 = vunpack.c.l.b16 %v467
    %v506 = vunpack.c.l.b16 %v468
    %v507 = vunpack.c.l.b16 %v469
    %v508 = vunpack.c.l.b16 %v470
    %v509 = vunpack.c.l.b16 %v471
    %v510 = vunpack.c.l.b16 %v472
    %v511 = vunpack.c.l.b16 %v473
    %v512 = vunpack.c.l.b16 %v474
    %v513 = vpack.c.b16 %v498, %v497
    %v514 = vpack.c.b16 %v500, %v499
    %v515 = vpack.c.b16 %v502, %v501
    %v516 = vpack.c.b16 %v504, %v503
    %v517 = vpack.c.b16 %v506, %v505
    %v518 = vpack.c.b16 %v508, %v507
    %v519 = vpack.c.b16 %v510, %v509
    %v520 = vpack.c.b16 %v512, %v511
    %529 = vmatprep.subr.bf16.mxu0 0
    %530 = vmatpush1.bf16.msra.mxu0 %v513
    %531 = vmatprep.subr.bf16.mxu0 0
    %532 = vmatpush1.bf16.msra.mxu0 %v514
    %533 = vmatprep.subr.bf16.mxu0 0
    %534 = vmatpush1.bf16.msra.mxu0 %v515
    %535 = vmatprep.subr.bf16.mxu0 0
    %536 = vmatpush1.bf16.msra.mxu0 %v516
    %537 = vmatprep.subr.bf16.mxu0 0
    %538 = vmatpush1.bf16.msra.mxu0 %v517
    %539 = vmatprep.subr.bf16.mxu0 0
    %540 = vmatpush1.bf16.msra.mxu0 %v518
    %541 = vmatprep.subr.bf16.mxu0 0
    %542 = vmatpush1.bf16.msra.mxu0 %v519
    %543 = vmatprep.subr.bf16.mxu0 0
    %544 = vmatpush1.bf16.msra.mxu0 %v520
    %545 = vmatprep.subr.bf16.mxu0 0
    %546 = vmatpush1.bf16.msra.mxu0 0
    %547 = vmatprep.subr.bf16.mxu0 0
    %548 = vmatpush1.bf16.msra.mxu0 0
    %549 = vmatprep.subr.bf16.mxu0 0
    %550 = vmatpush1.bf16.msra.mxu0 0
    %551 = vmatprep.subr.bf16.mxu0 0
    %552 = vmatpush1.bf16.msra.mxu0 0
    %553 = vmatprep.subr.bf16.mxu0 0
    %554 = vmatpush1.bf16.msra.mxu0 0
    %555 = vmatprep.subr.bf16.mxu0 0
    %556 = vmatpush1.bf16.msra.mxu0 0
    %557 = vmatprep.subr.bf16.mxu0 0
    %558 = vmatpush1.bf16.msra.mxu0 0
    %559 = vmatprep.subr.bf16.mxu0 0
    %560 = vmatpush1.bf16.msra.mxu0 0
    %561 = vmatprep.mubr.bf16.mxu0 0
    %562 = vmatmul.mubr.bf16.gmra.mrb[0].mxu0 %v476
    %v563 = vpop.f32.mrb[0].mxu0
    %v564 = vadd.f32 %v480, %v563
    %v565 = vpop.f32.mrb[0].mxu0
    %v566 = vpop.f32.mrb[0].mxu0
    %v567 = vpop.f32.mrb[0].mxu0
    %568 = vdwg.mxu0
    %vm569 = vcmp.gt.f32.partialorder %v564, 0.0
    %v570 = vmul.f32 %v564, 0.1
    %v571 = vsel %vm569, %v564, %v570
    %v572 = vld [vmem:[#allocation8 + $0x40] sm:$0xf]
    %v573 = vld [vmem:[#allocation8 + $0x44] sm:$0xf]
    %v574 = vld [vmem:[#allocation8 + $0x48] sm:$0xf]
    %v575 = vld [vmem:[#allocation8 + $0x4c] sm:$0xf]
    %v576 = vld [vmem:[#allocation8 + $0x50] sm:$0xf]
    %v577 = vld [vmem:[#allocation8 + $0x54] sm:$0xf]
    %v578 = vld [vmem:[#allocation8 + $0x58] sm:$0xf]
    %v579 = vld [vmem:[#allocation8 + $0x5c] sm:$0xf]
    %v580 = vld [vmem:[#allocation8 + $0x60] sm:$0xf]
    %v581 = vld [vmem:[#allocation8 + $0x64] sm:$0xf]
    %v582 = vld [vmem:[#allocation8 + $0x68] sm:$0xf]
    %v583 = vld [vmem:[#allocation8 + $0x6c] sm:$0xf]
    %v584 = vld [vmem:[#allocation8 + $0x70] sm:$0xf]
    %v585 = vld [vmem:[#allocation8 + $0x74] sm:$0xf]
    %v586 = vld [vmem:[#allocation8 + $0x78] sm:$0xf]
    %v587 = vld [vmem:[#allocation8 + $0x7c] sm:$0xf]
    %v588 = vld [vmem:[%s4 + $0x1] sm:$0x1]
    %v589 = vpack.c.bf16 %v571, %v571
    %v590 = vlaneseq
    %v591 = vshrl.u32 %v590, 7
    %v592 = vsub.s32 0, %v591
    %v593 = vrot.slane %v588, %v592
    %v610 = vunpack.c.l.b16 %v572
    %v611 = vunpack.c.l.b16 %v573
    %v612 = vunpack.c.l.b16 %v574
    %v613 = vunpack.c.l.b16 %v575
    %v614 = vunpack.c.l.b16 %v576
    %v615 = vunpack.c.l.b16 %v577
    %v616 = vunpack.c.l.b16 %v578
    %v617 = vunpack.c.l.b16 %v579
    %v618 = vunpack.c.l.b16 %v580
    %v619 = vunpack.c.l.b16 %v581
    %v620 = vunpack.c.l.b16 %v582
    %v621 = vunpack.c.l.b16 %v583
    %v622 = vunpack.c.l.b16 %v584
    %v623 = vunpack.c.l.b16 %v585
    %v624 = vunpack.c.l.b16 %v586
    %v625 = vunpack.c.l.b16 %v587
    %v626 = vpack.c.b16 %v611, %v610
    %v627 = vpack.c.b16 %v613, %v612
    %v628 = vpack.c.b16 %v615, %v614
    %v629 = vpack.c.b16 %v617, %v616
    %v630 = vpack.c.b16 %v619, %v618
    %v631 = vpack.c.b16 %v621, %v620
    %v632 = vpack.c.b16 %v623, %v622
    %v633 = vpack.c.b16 %v625, %v624
    %642 = vmatprep.subr.bf16.mxu0 0
    %643 = vmatpush1.bf16.msra.mxu0 %v626
    %644 = vmatprep.subr.bf16.mxu0 0
    %645 = vmatpush1.bf16.msra.mxu0 %v627
    %646 = vmatprep.subr.bf16.mxu0 0
    %647 = vmatpush1.bf16.msra.mxu0 %v628
    %648 = vmatprep.subr.bf16.mxu0 0
    %649 = vmatpush1.bf16.msra.mxu0 %v629
    %650 = vmatprep.subr.bf16.mxu0 0
    %651 = vmatpush1.bf16.msra.mxu0 %v630
    %652 = vmatprep.subr.bf16.mxu0 0
    %653 = vmatpush1.bf16.msra.mxu0 %v631
    %654 = vmatprep.subr.bf16.mxu0 0
    %655 = vmatpush1.bf16.msra.mxu0 %v632
    %656 = vmatprep.subr.bf16.mxu0 0
    %657 = vmatpush1.bf16.msra.mxu0 %v633
    %658 = vmatprep.subr.bf16.mxu0 0
    %659 = vmatpush1.bf16.msra.mxu0 0
    %660 = vmatprep.subr.bf16.mxu0 0
    %661 = vmatpush1.bf16.msra.mxu0 0
    %662 = vmatprep.subr.bf16.mxu0 0
    %663 = vmatpush1.bf16.msra.mxu0 0
    %664 = vmatprep.subr.bf16.mxu0 0
    %665 = vmatpush1.bf16.msra.mxu0 0
    %666 = vmatprep.subr.bf16.mxu0 0
    %667 = vmatpush1.bf16.msra.mxu0 0
    %668 = vmatprep.subr.bf16.mxu0 0
    %669 = vmatpush1.bf16.msra.mxu0 0
    %670 = vmatprep.subr.bf16.mxu0 0
    %671 = vmatpush1.bf16.msra.mxu0 0
    %672 = vmatprep.subr.bf16.mxu0 0
    %673 = vmatpush1.bf16.msra.mxu0 0
    %674 = vmatprep.mubr.bf16.mxu0 0
    %675 = vmatmul.mubr.bf16.gmra.mrb[0].mxu0 %v589
    %v676 = vpop.f32.mrb[0].mxu0
    %v677 = vadd.f32 %v593, %v676
    %v678 = vpop.f32.mrb[0].mxu0
    %v679 = vpop.f32.mrb[0].mxu0
    %v680 = vpop.f32.mrb[0].mxu0
    %681 = vdwg.mxu0
    %vm682 = vcmp.gt.f32.partialorder %v677, 0.0
    %v683 = vmul.f32 %v677, 0.1
    %v684 = vsel %vm682, %v677, %v683
    %v685 = vld [vmem:[#allocation8 + $0x80] sm:$0xf]
    %v686 = vld [vmem:[#allocation8 + $0x84] sm:$0xf]
    %v687 = vld [vmem:[#allocation8 + $0x88] sm:$0xf]
    %v688 = vld [vmem:[#allocation8 + $0x8c] sm:$0xf]
    %v689 = vld [vmem:[#allocation8 + $0x90] sm:$0xf]
    %v690 = vld [vmem:[#allocation8 + $0x94] sm:$0xf]
    %v691 = vld [vmem:[#allocation8 + $0x98] sm:$0xf]
    %v692 = vld [vmem:[#allocation8 + $0x9c] sm:$0xf]
    %v693 = vld [vmem:[#allocation8 + $0xa0] sm:$0xf]
    %v694 = vld [vmem:[#allocation8 + $0xa4] sm:$0xf]
    %v695 = vld [vmem:[#allocation8 + $0xa8] sm:$0xf]
    %v696 = vld [vmem:[#allocation8 + $0xac] sm:$0xf]
    %v697 = vld [vmem:[#allocation8 + $0xb0] sm:$0xf]
    %v698 = vld [vmem:[#allocation8 + $0xb4] sm:$0xf]
    %v699 = vld [vmem:[#allocation8 + $0xb8] sm:$0xf]
    %v700 = vld [vmem:[#allocation8 + $0xbc] sm:$0xf]
    %v701 = vld [vmem:[%s4 + $0x2] sm:$0x1]
    %v702 = vpack.c.bf16 %v684, %v684
    %v703 = vlaneseq
    %v704 = vshrl.u32 %v703, 7
    %v705 = vsub.s32 0, %v704
    %v706 = vrot.slane %v701, %v705
    %v723 = vunpack.c.l.b16 %v685
    %v724 = vunpack.c.l.b16 %v686
    %v725 = vunpack.c.l.b16 %v687
    %v726 = vunpack.c.l.b16 %v688
    %v727 = vunpack.c.l.b16 %v689
    %v728 = vunpack.c.l.b16 %v690
    %v729 = vunpack.c.l.b16 %v691
    %v730 = vunpack.c.l.b16 %v692
    %v731 = vunpack.c.l.b16 %v693
    %v732 = vunpack.c.l.b16 %v694
    %v733 = vunpack.c.l.b16 %v695
    %v734 = vunpack.c.l.b16 %v696
    %v735 = vunpack.c.l.b16 %v697
    %v736 = vunpack.c.l.b16 %v698
    %v737 = vunpack.c.l.b16 %v699
    %v738 = vunpack.c.l.b16 %v700
    %v739 = vpack.c.b16 %v724, %v723
    %v740 = vpack.c.b16 %v726, %v725
    %v741 = vpack.c.b16 %v728, %v727
    %v742 = vpack.c.b16 %v730, %v729
    %v743 = vpack.c.b16 %v732, %v731
    %v744 = vpack.c.b16 %v734, %v733
    %v745 = vpack.c.b16 %v736, %v735
    %v746 = vpack.c.b16 %v738, %v737
    %755 = vmatprep.subr.bf16.mxu0 0
    %756 = vmatpush1.bf16.msra.mxu0 %v739
    %757 = vmatprep.subr.bf16.mxu0 0
    %758 = vmatpush1.bf16.msra.mxu0 %v740
    %759 = vmatprep.subr.bf16.mxu0 0
    %760 = vmatpush1.bf16.msra.mxu0 %v741
    %761 = vmatprep.subr.bf16.mxu0 0
    %762 = vmatpush1.bf16.msra.mxu0 %v742
    %763 = vmatprep.subr.bf16.mxu0 0
    %764 = vmatpush1.bf16.msra.mxu0 %v743
    %765 = vmatprep.subr.bf16.mxu0 0
    %766 = vmatpush1.bf16.msra.mxu0 %v744
    %767 = vmatprep.subr.bf16.mxu0 0
    %768 = vmatpush1.bf16.msra.mxu0 %v745
    %769 = vmatprep.subr.bf16.mxu0 0
    %770 = vmatpush1.bf16.msra.mxu0 %v746
    %771 = vmatprep.subr.bf16.mxu0 0
    %772 = vmatpush1.bf16.msra.mxu0 0
    %773 = vmatprep.subr.bf16.mxu0 0
    %774 = vmatpush1.bf16.msra.mxu0 0
    %775 = vmatprep.subr.bf16.mxu0 0
    %776 = vmatpush1.bf16.msra.mxu0 0
    %777 = vmatprep.subr.bf16.mxu0 0
    %778 = vmatpush1.bf16.msra.mxu0 0
    %779 = vmatprep.subr.bf16.mxu0 0
    %780 = vmatpush1.bf16.msra.mxu0 0
    %781 = vmatprep.subr.bf16.mxu0 0
    %782 = vmatpush1.bf16.msra.mxu0 0
    %783 = vmatprep.subr.bf16.mxu0 0
    %784 = vmatpush1.bf16.msra.mxu0 0
    %785 = vmatprep.subr.bf16.mxu0 0
    %786 = vmatpush1.bf16.msra.mxu0 0
    %787 = vmatprep.mubr.bf16.mxu0 0
    %788 = vmatmul.mubr.bf16.gmra.mrb[0].mxu0 %v702
    %v789 = vpop.f32.mrb[0].mxu0
    %v790 = vadd.f32 %v706, %v789
    %v791 = vpop.f32.mrb[0].mxu0
    %v792 = vpop.f32.mrb[0].mxu0
    %v793 = vpop.f32.mrb[0].mxu0
    %794 = vdwg.mxu0
    %795 = vst [vmem:[#allocation10] sm:$0xff] %v790
    // Predicated region
    $region38: #{tpu_custom_call.1} parent=1 // pred_check
      _
    $region39: #{tpu_custom_call.1} parent=1 // pred_check_branch
      %797 = sbr.rel (0) target = $region41
    $region40: #{tpu_custom_call.1} parent=1 // pred_region
      %s799 = ssub.s32 128, 128
      %800 = vsyncadd [#allocation4], %s799
      %s802 = sshll.u32 [#allocation10], 4
      %s803 = int_to_ptr.vmem [resolvable:$true] %s802
      %805 = dma.vmem_to_hbm [thread:$0]  %s803, 128, %s5, [#allocation4]
    $region41: #{tpu_custom_call.1} parent=1 // pred_fallthru
      _
    // Predicated region
    $region42: #{tpu_custom_call.1} parent=1 // pred_check
      _
    $region43: #{tpu_custom_call.1} parent=1 // pred_check_branch
      %807 = sbr.rel (0) target = $region45
    $region44: #{tpu_custom_call.1} parent=1 // pred_region
      %808 = dma.done [#allocation4], 128
    $region45: #{tpu_custom_call.1} parent=1 // pred_fallthru
      _
    %809 = vsyncpa [#allocation3], 1
    %810 = vsyncpa [#allocation6], 1
    %811 = vsyncpa [#allocation9], 1
    %812 = vsyncpa [#allocation4], 1

</llo_original>
